<compile_context>
chip_gen: v6e
topology: v6e:2x2x1
jax: 0.10.0
libtpu: 0.0.40
codegen_flags: <defaults>
</compile_context>

<pallas_src>
import jax
import jax.numpy as jnp
from jax import lax
from jax.experimental import pallas as pl
from jax.experimental.pallas import tpu as pltpu

C_IN = 3
C_OUT = 3
K = 3
PAD = 1


def conv1d_kernel(x_ref, wb_ref, o_ref):
    # x_ref:  (N, C_IN*L)  f32 in VMEM (row-major flatten of (N, C_IN, L))
    # wb_ref: (C_OUT*C_IN*K + C_OUT,) f32 in SMEM: 27 weights (o,i,k order) then 3 biases
    # o_ref:  (N, C_OUT*L) f32 in VMEM (lane-dense output slab)
    n = x_ref.shape[0]
    l = x_ref.shape[1] // C_IN

    # Lane-edge masks implementing padding=1 zero semantics (zeros outside [0, L)).
    lane = lax.broadcasted_iota(jnp.int32, (n, l), 1)
    not_first = lane > 0
    not_last = lane < (l - 1)

    # taps[i][k][row, pos] == x[row, i, pos + k - 1], with zeros past the edges.
    taps = []
    for i in range(C_IN):
        xi = x_ref[:, i * l:(i + 1) * l]  # static, 128-aligned slice -> free view
        # pltpu.roll requires non-negative shift: shift=1 gives x[pos-1],
        # shift=l-1 gives x[(pos+1) mod l]; the masks zero the wrapped edges.
        x_left = jnp.where(not_first, pltpu.roll(xi, shift=1, axis=1), 0.0)       # x[pos-1]
        x_right = jnp.where(not_last, pltpu.roll(xi, shift=l - 1, axis=1), 0.0)   # x[pos+1]
        taps.append((x_left, xi, x_right))

    bias_base = C_OUT * C_IN * K
    # 27 scalar-broadcast FMAs on the VPU; tree-summed partials per output channel.
    for o in range(C_OUT):
        partials = []
        for i in range(C_IN):
            base = (o * C_IN + i) * K
            p = (wb_ref[base + 0] * taps[i][0]
                 + wb_ref[base + 1] * taps[i][1]
                 + wb_ref[base + 2] * taps[i][2])
            partials.append(p)
        acc = (partials[0] + partials[1]) + (partials[2] + wb_ref[bias_base + o])
        o_ref[:, o * l:(o + 1) * l] = acc.astype(o_ref.dtype)


def conv1d_padding_one(x, w, b):
    """x: (N, C_IN, L) f32; w: (C_OUT, C_IN, K) f32; b: (C_OUT,) f32.

    Returns (N, C_OUT, L) f32, identical to torch.nn.Conv1d(3, 3, 3, padding=1).
    """
    N, _, L = x.shape
    # Metadata-only reshape (row-major): channel i lives at lanes [i*L, (i+1)*L).
    x_flat = x.reshape(N, C_IN * L)
    wb = jnp.concatenate([w.reshape(-1), b])  # (30,) -> one SMEM input

    out_flat = pl.pallas_call(
        conv1d_kernel,
        out_shape=jax.ShapeDtypeStruct((N, C_OUT * L), x.dtype),
        in_specs=[
            pl.BlockSpec(memory_space=pltpu.MemorySpace.VMEM),   # x (whole array)
            pl.BlockSpec(memory_space=pltpu.MemorySpace.SMEM),   # weights+bias (30 scalars)
        ],
        out_specs=pl.BlockSpec(memory_space=pltpu.MemorySpace.VMEM),
        cost_estimate=pl.CostEstimate(
            flops=2 * N * L * C_OUT * C_IN * K,
            bytes_accessed=2 * N * C_IN * L * 4,
            transcendentals=0,
        ),
    )(x_flat, wb)

    return out_flat.reshape(N, C_OUT, L)  # metadata-only reshape back


if __name__ == "__main__":
    key = jax.random.PRNGKey(0)
    kx, kw, kb = jax.random.split(key, 3)

    # Shapes from the module's get_example_inputs(): (10, 3, 128)
    N, L = 10, 128
    x = jax.random.normal(kx, (N, C_IN, L), dtype=jnp.float32)

    # Deterministic parameter init (uniform with PyTorch's default bound 1/sqrt(fan_in)).
    bound = 1.0 / jnp.sqrt(jnp.float32(C_IN * K))
    w = jax.random.uniform(kw, (C_OUT, C_IN, K), jnp.float32, -bound, bound)
    b = jax.random.uniform(kb, (C_OUT,), jnp.float32, -bound, bound)

    fn = jax.jit(conv1d_padding_one)
    out = jax.block_until_ready(fn(x, w, b))

    # Reference check against XLA's conv (same semantics as torch.nn.Conv1d).
    ref = lax.conv_general_dilated(
        x[:, :, None, :],                  # NCHW with H=1
        w[:, :, None, :],                  # OIHW with H=1
        window_strides=(1, 1),
        padding=((0, 0), (PAD, PAD)),
        dimension_numbers=("NCHW", "OIHW", "NCHW"),
    )[:, :, 0, :] + b[None, :, None]

    assert out.shape == (N, C_OUT, L)
    assert jnp.allclose(out, ref, atol=1e-5, rtol=1e-5)
    print("KERNEL_OK")
</pallas_src>

<mosaic_0001>
module attributes {stable_mosaic.version = 11 : i64} {
  func.func @conv1d_kernel(%arg0: memref<10x384xf32, #tpu.memory_space<vmem>>, %arg1: memref<30xf32, #tpu.memory_space<smem>>, %arg2: memref<10x384xf32, #tpu.memory_space<vmem>>) attributes {dimension_semantics = [], scalar_prefetch = 0 : i64, scratch_operands = 0 : i64, tpu.core_type = #tpu.core_type<tc>} {
    %0 = tpu.iota {dimensions = array<i32: 1>} : vector<10x128xi32>
    %c0_i32 = arith.constant 0 : i32
    %1 = vector.broadcast %c0_i32 : i32 to vector<10x128xi32>
    %2 = arith.cmpi sgt, %0, %1 : vector<10x128xi32>
    %c127_i32 = arith.constant 127 : i32
    %3 = vector.broadcast %c127_i32 : i32 to vector<10x128xi32>
    %4 = arith.cmpi slt, %0, %3 : vector<10x128xi32>
    %c0 = arith.constant 0 : index
    %c0_0 = arith.constant 0 : index
    %5 = vector.load %arg0[%c0, %c0_0] : memref<10x384xf32, #tpu.memory_space<vmem>>, vector<10x128xf32>
    %c1_i32 = arith.constant 1 : i32
    %6 = tpu.dynamic_rotate %5 by %c1_i32 dim 1 : vector<10x128xf32>, i32 -> vector<10x128xf32>
    %cst = arith.constant 0.000000e+00 : f32
    %7 = vector.broadcast %cst : f32 to vector<10x128xf32>
    %8 = arith.select %2, %6, %7 : vector<10x128xi1>, vector<10x128xf32>
    %c127_i32_1 = arith.constant 127 : i32
    %9 = tpu.dynamic_rotate %5 by %c127_i32_1 dim 1 : vector<10x128xf32>, i32 -> vector<10x128xf32>
    %cst_2 = arith.constant 0.000000e+00 : f32
    %10 = vector.broadcast %cst_2 : f32 to vector<10x128xf32>
    %11 = arith.select %4, %9, %10 : vector<10x128xi1>, vector<10x128xf32>
    %c0_3 = arith.constant 0 : index
    %c128 = arith.constant 128 : index
    %12 = vector.load %arg0[%c0_3, %c128] : memref<10x384xf32, #tpu.memory_space<vmem>>, vector<10x128xf32>
    %c1_i32_4 = arith.constant 1 : i32
    %13 = tpu.dynamic_rotate %12 by %c1_i32_4 dim 1 : vector<10x128xf32>, i32 -> vector<10x128xf32>
    %cst_5 = arith.constant 0.000000e+00 : f32
    %14 = vector.broadcast %cst_5 : f32 to vector<10x128xf32>
    %15 = arith.select %2, %13, %14 : vector<10x128xi1>, vector<10x128xf32>
    %c127_i32_6 = arith.constant 127 : i32
    %16 = tpu.dynamic_rotate %12 by %c127_i32_6 dim 1 : vector<10x128xf32>, i32 -> vector<10x128xf32>
    %cst_7 = arith.constant 0.000000e+00 : f32
    %17 = vector.broadcast %cst_7 : f32 to vector<10x128xf32>
    %18 = arith.select %4, %16, %17 : vector<10x128xi1>, vector<10x128xf32>
    %c0_8 = arith.constant 0 : index
    %c256 = arith.constant 256 : index
    %19 = vector.load %arg0[%c0_8, %c256] : memref<10x384xf32, #tpu.memory_space<vmem>>, vector<10x128xf32>
    %c1_i32_9 = arith.constant 1 : i32
    %20 = tpu.dynamic_rotate %19 by %c1_i32_9 dim 1 : vector<10x128xf32>, i32 -> vector<10x128xf32>
    %cst_10 = arith.constant 0.000000e+00 : f32
    %21 = vector.broadcast %cst_10 : f32 to vector<10x128xf32>
    %22 = arith.select %2, %20, %21 : vector<10x128xi1>, vector<10x128xf32>
    %c127_i32_11 = arith.constant 127 : i32
    %23 = tpu.dynamic_rotate %19 by %c127_i32_11 dim 1 : vector<10x128xf32>, i32 -> vector<10x128xf32>
    %cst_12 = arith.constant 0.000000e+00 : f32
    %24 = vector.broadcast %cst_12 : f32 to vector<10x128xf32>
    %25 = arith.select %4, %23, %24 : vector<10x128xi1>, vector<10x128xf32>
    %c0_13 = arith.constant 0 : index
    %26 = memref.load %arg1[%c0_13] : memref<30xf32, #tpu.memory_space<smem>>
    %27 = vector.broadcast %26 : f32 to vector<10x128xf32>
    %28 = arith.mulf %27, %8 : vector<10x128xf32>
    %c1 = arith.constant 1 : index
    %29 = memref.load %arg1[%c1] : memref<30xf32, #tpu.memory_space<smem>>
    %30 = vector.broadcast %29 : f32 to vector<10x128xf32>
    %31 = arith.mulf %30, %5 : vector<10x128xf32>
    %32 = arith.addf %28, %31 : vector<10x128xf32>
    %c2 = arith.constant 2 : index
    %33 = memref.load %arg1[%c2] : memref<30xf32, #tpu.memory_space<smem>>
    %34 = vector.broadcast %33 : f32 to vector<10x128xf32>
    %35 = arith.mulf %34, %11 : vector<10x128xf32>
    %36 = arith.addf %32, %35 : vector<10x128xf32>
    %c3 = arith.constant 3 : index
    %37 = memref.load %arg1[%c3] : memref<30xf32, #tpu.memory_space<smem>>
    %38 = vector.broadcast %37 : f32 to vector<10x128xf32>
    %39 = arith.mulf %38, %15 : vector<10x128xf32>
    %c4 = arith.constant 4 : index
    %40 = memref.load %arg1[%c4] : memref<30xf32, #tpu.memory_space<smem>>
    %41 = vector.broadcast %40 : f32 to vector<10x128xf32>
    %42 = arith.mulf %41, %12 : vector<10x128xf32>
    %43 = arith.addf %39, %42 : vector<10x128xf32>
    %c5 = arith.constant 5 : index
    %44 = memref.load %arg1[%c5] : memref<30xf32, #tpu.memory_space<smem>>
    %45 = vector.broadcast %44 : f32 to vector<10x128xf32>
    %46 = arith.mulf %45, %18 : vector<10x128xf32>
    %47 = arith.addf %43, %46 : vector<10x128xf32>
    %c6 = arith.constant 6 : index
    %48 = memref.load %arg1[%c6] : memref<30xf32, #tpu.memory_space<smem>>
    %49 = vector.broadcast %48 : f32 to vector<10x128xf32>
    %50 = arith.mulf %49, %22 : vector<10x128xf32>
    %c7 = arith.constant 7 : index
    %51 = memref.load %arg1[%c7] : memref<30xf32, #tpu.memory_space<smem>>
    %52 = vector.broadcast %51 : f32 to vector<10x128xf32>
    %53 = arith.mulf %52, %19 : vector<10x128xf32>
    %54 = arith.addf %50, %53 : vector<10x128xf32>
    %c8 = arith.constant 8 : index
    %55 = memref.load %arg1[%c8] : memref<30xf32, #tpu.memory_space<smem>>
    %56 = vector.broadcast %55 : f32 to vector<10x128xf32>
    %57 = arith.mulf %56, %25 : vector<10x128xf32>
    %58 = arith.addf %54, %57 : vector<10x128xf32>
    %59 = arith.addf %36, %47 : vector<10x128xf32>
    %c27 = arith.constant 27 : index
    %60 = memref.load %arg1[%c27] : memref<30xf32, #tpu.memory_space<smem>>
    %61 = vector.broadcast %60 : f32 to vector<10x128xf32>
    %62 = arith.addf %58, %61 : vector<10x128xf32>
    %63 = arith.addf %59, %62 : vector<10x128xf32>
    %c0_14 = arith.constant 0 : index
    %c0_15 = arith.constant 0 : index
    %64 = vector.load %arg2[%c0_14, %c0_15] : memref<10x384xf32, #tpu.memory_space<vmem>>, vector<10x128xf32>
    tpu.vector_store %arg2[%c0_14, %c0_15], %63 {strides = array<i32>} : memref<10x384xf32, #tpu.memory_space<vmem>>, vector<10x128xf32>,
    %c9 = arith.constant 9 : index
    %65 = memref.load %arg1[%c9] : memref<30xf32, #tpu.memory_space<smem>>
    %66 = vector.broadcast %65 : f32 to vector<10x128xf32>
    %67 = arith.mulf %66, %8 : vector<10x128xf32>
    %c10 = arith.constant 10 : index
    %68 = memref.load %arg1[%c10] : memref<30xf32, #tpu.memory_space<smem>>
    %69 = vector.broadcast %68 : f32 to vector<10x128xf32>
    %70 = arith.mulf %69, %5 : vector<10x128xf32>
    %71 = arith.addf %67, %70 : vector<10x128xf32>
    %c11 = arith.constant 11 : index
    %72 = memref.load %arg1[%c11] : memref<30xf32, #tpu.memory_space<smem>>
    %73 = vector.broadcast %72 : f32 to vector<10x128xf32>
    %74 = arith.mulf %73, %11 : vector<10x128xf32>
    %75 = arith.addf %71, %74 : vector<10x128xf32>
    %c12 = arith.constant 12 : index
    %76 = memref.load %arg1[%c12] : memref<30xf32, #tpu.memory_space<smem>>
    %77 = vector.broadcast %76 : f32 to vector<10x128xf32>
    %78 = arith.mulf %77, %15 : vector<10x128xf32>
    %c13 = arith.constant 13 : index
    %79 = memref.load %arg1[%c13] : memref<30xf32, #tpu.memory_space<smem>>
    %80 = vector.broadcast %79 : f32 to vector<10x128xf32>
    %81 = arith.mulf %80, %12 : vector<10x128xf32>
    %82 = arith.addf %78, %81 : vector<10x128xf32>
    %c14 = arith.constant 14 : index
    %83 = memref.load %arg1[%c14] : memref<30xf32, #tpu.memory_space<smem>>
    %84 = vector.broadcast %83 : f32 to vector<10x128xf32>
    %85 = arith.mulf %84, %18 : vector<10x128xf32>
    %86 = arith.addf %82, %85 : vector<10x128xf32>
    %c15 = arith.constant 15 : index
    %87 = memref.load %arg1[%c15] : memref<30xf32, #tpu.memory_space<smem>>
    %88 = vector.broadcast %87 : f32 to vector<10x128xf32>
    %89 = arith.mulf %88, %22 : vector<10x128xf32>
    %c16 = arith.constant 16 : index
    %90 = memref.load %arg1[%c16] : memref<30xf32, #tpu.memory_space<smem>>
    %91 = vector.broadcast %90 : f32 to vector<10x128xf32>
    %92 = arith.mulf %91, %19 : vector<10x128xf32>
    %93 = arith.addf %89, %92 : vector<10x128xf32>
    %c17 = arith.constant 17 : index
    %94 = memref.load %arg1[%c17] : memref<30xf32, #tpu.memory_space<smem>>
    %95 = vector.broadcast %94 : f32 to vector<10x128xf32>
    %96 = arith.mulf %95, %25 : vector<10x128xf32>
    %97 = arith.addf %93, %96 : vector<10x128xf32>
    %98 = arith.addf %75, %86 : vector<10x128xf32>
    %c28 = arith.constant 28 : index
    %99 = memref.load %arg1[%c28] : memref<30xf32, #tpu.memory_space<smem>>
    %100 = vector.broadcast %99 : f32 to vector<10x128xf32>
    %101 = arith.addf %97, %100 : vector<10x128xf32>
    %102 = arith.addf %98, %101 : vector<10x128xf32>
    %c0_16 = arith.constant 0 : index
    %c128_17 = arith.constant 128 : index
    %103 = vector.load %arg2[%c0_16, %c128_17] : memref<10x384xf32, #tpu.memory_space<vmem>>, vector<10x128xf32>
    tpu.vector_store %arg2[%c0_16, %c128_17], %102 {strides = array<i32>} : memref<10x384xf32, #tpu.memory_space<vmem>>, vector<10x128xf32>,
    %c18 = arith.constant 18 : index
    %104 = memref.load %arg1[%c18] : memref<30xf32, #tpu.memory_space<smem>>
    %105 = vector.broadcast %104 : f32 to vector<10x128xf32>
    %106 = arith.mulf %105, %8 : vector<10x128xf32>
    %c19 = arith.constant 19 : index
    %107 = memref.load %arg1[%c19] : memref<30xf32, #tpu.memory_space<smem>>
    %108 = vector.broadcast %107 : f32 to vector<10x128xf32>
    %109 = arith.mulf %108, %5 : vector<10x128xf32>
    %110 = arith.addf %106, %109 : vector<10x128xf32>
    %c20 = arith.constant 20 : index
    %111 = memref.load %arg1[%c20] : memref<30xf32, #tpu.memory_space<smem>>
    %112 = vector.broadcast %111 : f32 to vector<10x128xf32>
    %113 = arith.mulf %112, %11 : vector<10x128xf32>
    %114 = arith.addf %110, %113 : vector<10x128xf32>
    %c21 = arith.constant 21 : index
    %115 = memref.load %arg1[%c21] : memref<30xf32, #tpu.memory_space<smem>>
    %116 = vector.broadcast %115 : f32 to vector<10x128xf32>
    %117 = arith.mulf %116, %15 : vector<10x128xf32>
    %c22 = arith.constant 22 : index
    %118 = memref.load %arg1[%c22] : memref<30xf32, #tpu.memory_space<smem>>
    %119 = vector.broadcast %118 : f32 to vector<10x128xf32>
    %120 = arith.mulf %119, %12 : vector<10x128xf32>
    %121 = arith.addf %117, %120 : vector<10x128xf32>
    %c23 = arith.constant 23 : index
    %122 = memref.load %arg1[%c23] : memref<30xf32, #tpu.memory_space<smem>>
    %123 = vector.broadcast %122 : f32 to vector<10x128xf32>
    %124 = arith.mulf %123, %18 : vector<10x128xf32>
    %125 = arith.addf %121, %124 : vector<10x128xf32>
    %c24 = arith.constant 24 : index
    %126 = memref.load %arg1[%c24] : memref<30xf32, #tpu.memory_space<smem>>
    %127 = vector.broadcast %126 : f32 to vector<10x128xf32>
    %128 = arith.mulf %127, %22 : vector<10x128xf32>
    %c25 = arith.constant 25 : index
    %129 = memref.load %arg1[%c25] : memref<30xf32, #tpu.memory_space<smem>>
    %130 = vector.broadcast %129 : f32 to vector<10x128xf32>
    %131 = arith.mulf %130, %19 : vector<10x128xf32>
    %132 = arith.addf %128, %131 : vector<10x128xf32>
    %c26 = arith.constant 26 : index
    %133 = memref.load %arg1[%c26] : memref<30xf32, #tpu.memory_space<smem>>
    %134 = vector.broadcast %133 : f32 to vector<10x128xf32>
    %135 = arith.mulf %134, %25 : vector<10x128xf32>
    %136 = arith.addf %132, %135 : vector<10x128xf32>
    %137 = arith.addf %114, %125 : vector<10x128xf32>
    %c29 = arith.constant 29 : index
    %138 = memref.load %arg1[%c29] : memref<30xf32, #tpu.memory_space<smem>>
    %139 = vector.broadcast %138 : f32 to vector<10x128xf32>
    %140 = arith.addf %136, %139 : vector<10x128xf32>
    %141 = arith.addf %137, %140 : vector<10x128xf32>
    %c0_18 = arith.constant 0 : index
    %c256_19 = arith.constant 256 : index
    %142 = vector.load %arg2[%c0_18, %c256_19] : memref<10x384xf32, #tpu.memory_space<vmem>>, vector<10x128xf32>
    tpu.vector_store %arg2[%c0_18, %c256_19], %141 {strides = array<i32>} : memref<10x384xf32, #tpu.memory_space<vmem>>, vector<10x128xf32>,
    return
  }
}

</mosaic_0001>

<llo_original>
// kernel: conv1d_padding_one.1
$region0: #{conv1d_padding_one.1}
  #allocation0 [shape = 'u32[]', space=smem, size = 0x4, offset = 0x4, fixed_abs, tag = 'smem constant byte address 0x4 - core index']
  #allocation1 [shape = 'u32[144,128]{1,0:T(1,128)}', space=vmem, size = 0x12000, scoped, tag = 'internal scratch']
  %s0 = inlined_call_operand.vmem [shape: f32[10,384], index: 0, kind: input, shape index: {}]
  %s1 = inlined_call_operand.vmem [shape: f32[30], index: 1, kind: input, shape index: {}]
  %s2 = inlined_call_operand.vmem [shape: f32[10,384], index: 2, kind: output, shape index: {}]
  %s3 = sld [smem:[#allocation0]]
  $region22: #{conv1d_padding_one.1} parent=0
    _
  %s5 = ssub.s32 1, %s3
  %s6 = scalar_select 0, %s5, %s3
  $region1: #{conv1d_padding_one.1} parent=0
    #allocation2 [shape = 'u8[512]{0}', space=smem, size = 0x200, scoped, tag = 'input window, operand 1, single buffered']
    #allocation3 [shape = 's32[1]{0}', space=sflag, size = 0x4, scoped, tag = 'scoped memory for conv1d_padding_one.1']
    %7 = vsyncpa [#allocation3], 0
    // Predicated region
    $region2: #{conv1d_padding_one.1} parent=1 // pred_check
      _
    $region3: #{conv1d_padding_one.1} parent=1 // pred_check_branch
      %9 = sbr.rel (0) target = $region5
    $region4: #{conv1d_padding_one.1} parent=1 // pred_region
      _
    $region5: #{conv1d_padding_one.1} parent=1 // pred_fallthru
      _
    // Predicated region
    $region6: #{conv1d_padding_one.1} parent=1 // pred_check
      _
    $region7: #{conv1d_padding_one.1} parent=1 // pred_check_branch
      %11 = sbr.rel (0) target = $region9
    $region8: #{conv1d_padding_one.1} parent=1 // pred_region
      %s13 = ssub.s32 16, 16
      %14 = vsyncadd [#allocation3], %s13
      %s16 = sshll.u32 %s1, 4
      %s17 = int_to_ptr.vmem [resolvable:$true] %s16
      %19 = dma.vmem_to_smem %s17, 16, [#allocation2], [#allocation3]
    $region9: #{conv1d_padding_one.1} parent=1 // pred_fallthru
      _
    // Predicated region
    $region10: #{conv1d_padding_one.1} parent=1 // pred_check
      _
    $region11: #{conv1d_padding_one.1} parent=1 // pred_check_branch
      %21 = sbr.rel (0) target = $region13
    $region12: #{conv1d_padding_one.1} parent=1 // pred_region
      %22 = dma.done [#allocation3], 16
    $region13: #{conv1d_padding_one.1} parent=1 // pred_fallthru
      _
    %23 = sfence
    %v24 = vlaneseq
    %v25 = vand.u32 %v24, 127
    %vm26 = vcmp.gt.s32.totalorder %v25, 0
    %vm27 = vcmp.lt.s32.totalorder %v25, 127
    %v28 = vld [vmem:[%s0] sm:$0xff]
    %v29 = vld [vmem:[%s0 + $0x18] sm:$0x3]
    %30 = vrot.lane.b32.xlu0 %v28, 1
    %v31 = vpop.permute.xlu0 %30
    %32 = vrot.lane.b32.xlu0 %v29, 1
    %v33 = vpop.permute.xlu0 %32
    %v34 = vsel %vm26, %v31, 0.0
    %v35 = vsel %vm26, %v33, 0.0
    %36 = vrot.lane.b32.xlu0 %v28, 127
    %v37 = vpop.permute.xlu0 %36
    %38 = vrot.lane.b32.xlu0 %v29, 127
    %v39 = vpop.permute.xlu0 %38
    %v40 = vsel %vm27, %v37, 0.0
    %v41 = vsel %vm27, %v39, 0.0
    %v42 = vld [vmem:[%s0 + $0x8] sm:$0xff]
    %v43 = vld [vmem:[%s0 + $0x20] sm:$0x3]
    %44 = vrot.lane.b32.xlu0 %v42, 1
    %v45 = vpop.permute.xlu0 %44
    %46 = vrot.lane.b32.xlu0 %v43, 1
    %v47 = vpop.permute.xlu0 %46
    %v48 = vsel %vm26, %v45, 0.0
    %v49 = vsel %vm26, %v47, 0.0
    %50 = vrot.lane.b32.xlu0 %v42, 127
    %v51 = vpop.permute.xlu0 %50
    %52 = vrot.lane.b32.xlu0 %v43, 127
    %v53 = vpop.permute.xlu0 %52
    %v54 = vsel %vm27, %v51, 0.0
    %v55 = vsel %vm27, %v53, 0.0
    %v56 = vld [vmem:[%s0 + $0x10] sm:$0xff]
    %v57 = vld [vmem:[%s0 + $0x28] sm:$0x3]
    %58 = vrot.lane.b32.xlu0 %v56, 1
    %v59 = vpop.permute.xlu0 %58
    %60 = vrot.lane.b32.xlu0 %v57, 1
    %v61 = vpop.permute.xlu0 %60
    %v62 = vsel %vm26, %v59, 0.0
    %v63 = vsel %vm26, %v61, 0.0
    %64 = vrot.lane.b32.xlu0 %v56, 127
    %v65 = vpop.permute.xlu0 %64
    %66 = vrot.lane.b32.xlu0 %v57, 127
    %v67 = vpop.permute.xlu0 %66
    %v68 = vsel %vm27, %v65, 0.0
    %v69 = vsel %vm27, %v67, 0.0
    %s70 = sld [smem:[#allocation2]]
    %v71 = vstv %s70
    %v72 = vmul.f32 %v71, %v34
    %v73 = vmul.f32 %v71, %v35
    %s74 = sld [smem:[#allocation2 + $0x1]]
    %v75 = vstv %s74
    %v76 = vmul.f32 %v75, %v28
    %v77 = vmul.f32 %v75, %v29
    %v78 = vadd.f32 %v72, %v76
    %v79 = vadd.f32 %v73, %v77
    %s80 = sld [smem:[#allocation2 + $0x2]]
    %v81 = vstv %s80
    %v82 = vmul.f32 %v81, %v40
    %v83 = vmul.f32 %v81, %v41
    %v84 = vadd.f32 %v78, %v82
    %v85 = vadd.f32 %v79, %v83
    %s86 = sld [smem:[#allocation2 + $0x3]]
    %v87 = vstv %s86
    %v88 = vmul.f32 %v87, %v48
    %v89 = vmul.f32 %v87, %v49
    %s90 = sld [smem:[#allocation2 + $0x4]]
    %v91 = vstv %s90
    %v92 = vmul.f32 %v91, %v42
    %v93 = vmul.f32 %v91, %v43
    %v94 = vadd.f32 %v88, %v92
    %v95 = vadd.f32 %v89, %v93
    %s96 = sld [smem:[#allocation2 + $0x5]]
    %v97 = vstv %s96
    %v98 = vmul.f32 %v97, %v54
    %v99 = vmul.f32 %v97, %v55
    %v100 = vadd.f32 %v94, %v98
    %v101 = vadd.f32 %v95, %v99
    %s102 = sld [smem:[#allocation2 + $0x6]]
    %v103 = vstv %s102
    %v104 = vmul.f32 %v103, %v62
    %v105 = vmul.f32 %v103, %v63
    %s106 = sld [smem:[#allocation2 + $0x7]]
    %v107 = vstv %s106
    %v108 = vmul.f32 %v107, %v56
    %v109 = vmul.f32 %v107, %v57
    %v110 = vadd.f32 %v104, %v108
    %v111 = vadd.f32 %v105, %v109
    %s112 = sld [smem:[#allocation2 + $0x8]]
    %v113 = vstv %s112
    %v114 = vmul.f32 %v113, %v68
    %v115 = vmul.f32 %v113, %v69
    %v116 = vadd.f32 %v110, %v114
    %v117 = vadd.f32 %v111, %v115
    %v118 = vadd.f32 %v84, %v100
    %v119 = vadd.f32 %v85, %v101
    %s120 = sld [smem:[#allocation2 + $0x1b]]
    %v121 = vstv %s120
    %v122 = vadd.f32 %v116, %v121
    %v123 = vadd.f32 %v117, %v121
    %v124 = vadd.f32 %v118, %v122
    %v125 = vadd.f32 %v119, %v123
    %126 = vst [vmem:[%s2] sm:$0xff] %v124
    %127 = vst [vmem:[%s2 + $0x18] sm:$0x3] %v125
    %s128 = sld [smem:[#allocation2 + $0x9]]
    %v129 = vstv %s128
    %v130 = vmul.f32 %v129, %v34
    %v131 = vmul.f32 %v129, %v35
    %s132 = sld [smem:[#allocation2 + $0xa]]
    %v133 = vstv %s132
    %v134 = vmul.f32 %v133, %v28
    %v135 = vmul.f32 %v133, %v29
    %v136 = vadd.f32 %v130, %v134
    %v137 = vadd.f32 %v131, %v135
    %s138 = sld [smem:[#allocation2 + $0xb]]
    %v139 = vstv %s138
    %v140 = vmul.f32 %v139, %v40
    %v141 = vmul.f32 %v139, %v41
    %v142 = vadd.f32 %v136, %v140
    %v143 = vadd.f32 %v137, %v141
    %s144 = sld [smem:[#allocation2 + $0xc]]
    %v145 = vstv %s144
    %v146 = vmul.f32 %v145, %v48
    %v147 = vmul.f32 %v145, %v49
    %s148 = sld [smem:[#allocation2 + $0xd]]
    %v149 = vstv %s148
    %v150 = vmul.f32 %v149, %v42
    %v151 = vmul.f32 %v149, %v43
    %v152 = vadd.f32 %v146, %v150
    %v153 = vadd.f32 %v147, %v151
    %s154 = sld [smem:[#allocation2 + $0xe]]
    %v155 = vstv %s154
    %v156 = vmul.f32 %v155, %v54
    %v157 = vmul.f32 %v155, %v55
    %v158 = vadd.f32 %v152, %v156
    %v159 = vadd.f32 %v153, %v157
    %s160 = sld [smem:[#allocation2 + $0xf]]
    %v161 = vstv %s160
    %v162 = vmul.f32 %v161, %v62
    %v163 = vmul.f32 %v161, %v63
    %s164 = sld [smem:[#allocation2 + $0x10]]
    %v165 = vstv %s164
    %v166 = vmul.f32 %v165, %v56
    %v167 = vmul.f32 %v165, %v57
    %v168 = vadd.f32 %v162, %v166
    %v169 = vadd.f32 %v163, %v167
    %s170 = sld [smem:[#allocation2 + $0x11]]
    %v171 = vstv %s170
    %v172 = vmul.f32 %v171, %v68
    %v173 = vmul.f32 %v171, %v69
    %v174 = vadd.f32 %v168, %v172
    %v175 = vadd.f32 %v169, %v173
    %v176 = vadd.f32 %v142, %v158
    %v177 = vadd.f32 %v143, %v159
    %s178 = sld [smem:[#allocation2 + $0x1c]]
    %v179 = vstv %s178
    %v180 = vadd.f32 %v174, %v179
    %v181 = vadd.f32 %v175, %v179
    %v182 = vadd.f32 %v176, %v180
    %v183 = vadd.f32 %v177, %v181
    %184 = vst [vmem:[%s2 + $0x8] sm:$0xff] %v182
    %185 = vst [vmem:[%s2 + $0x20] sm:$0x3] %v183
    %s186 = sld [smem:[#allocation2 + $0x12]]
    %v187 = vstv %s186
    %v188 = vmul.f32 %v187, %v34
    %v189 = vmul.f32 %v187, %v35
    %s190 = sld [smem:[#allocation2 + $0x13]]
    %v191 = vstv %s190
    %v192 = vmul.f32 %v191, %v28
    %v193 = vmul.f32 %v191, %v29
    %v194 = vadd.f32 %v188, %v192
    %v195 = vadd.f32 %v189, %v193
    %s196 = sld [smem:[#allocation2 + $0x14]]
    %v197 = vstv %s196
    %v198 = vmul.f32 %v197, %v40
    %v199 = vmul.f32 %v197, %v41
    %v200 = vadd.f32 %v194, %v198
    %v201 = vadd.f32 %v195, %v199
    %s202 = sld [smem:[#allocation2 + $0x15]]
    %v203 = vstv %s202
    %v204 = vmul.f32 %v203, %v48
    %v205 = vmul.f32 %v203, %v49
    %s206 = sld [smem:[#allocation2 + $0x16]]
    %v207 = vstv %s206
    %v208 = vmul.f32 %v207, %v42
    %v209 = vmul.f32 %v207, %v43
    %v210 = vadd.f32 %v204, %v208
    %v211 = vadd.f32 %v205, %v209
    %s212 = sld [smem:[#allocation2 + $0x17]]
    %v213 = vstv %s212
    %v214 = vmul.f32 %v213, %v54
    %v215 = vmul.f32 %v213, %v55
    %v216 = vadd.f32 %v210, %v214
    %v217 = vadd.f32 %v211, %v215
    %s218 = sld [smem:[#allocation2 + $0x18]]
    %v219 = vstv %s218
    %v220 = vmul.f32 %v219, %v62
    %v221 = vmul.f32 %v219, %v63
    %s222 = sld [smem:[#allocation2 + $0x19]]
    %v223 = vstv %s222
    %v224 = vmul.f32 %v223, %v56
    %v225 = vmul.f32 %v223, %v57
    %v226 = vadd.f32 %v220, %v224
    %v227 = vadd.f32 %v221, %v225
    %s228 = sld [smem:[#allocation2 + $0x1a]]
    %v229 = vstv %s228
    %v230 = vmul.f32 %v229, %v68
    %v231 = vmul.f32 %v229, %v69
    %v232 = vadd.f32 %v226, %v230
    %v233 = vadd.f32 %v227, %v231
    %v234 = vadd.f32 %v200, %v216
    %v235 = vadd.f32 %v201, %v217
    %s236 = sld [smem:[#allocation2 + $0x1d]]
    %v237 = vstv %s236
    %v238 = vadd.f32 %v232, %v237
    %v239 = vadd.f32 %v233, %v237
    %v240 = vadd.f32 %v234, %v238
    %v241 = vadd.f32 %v235, %v239
    %242 = vst [vmem:[%s2 + $0x10] sm:$0xff] %v240
    %243 = vst [vmem:[%s2 + $0x28] sm:$0x3] %v241
    // Predicated region
    $region14: #{conv1d_padding_one.1} parent=1 // pred_check
      _
    $region15: #{conv1d_padding_one.1} parent=1 // pred_check_branch
      %245 = sbr.rel (0) target = $region17
    $region16: #{conv1d_padding_one.1} parent=1 // pred_region
      _
    $region17: #{conv1d_padding_one.1} parent=1 // pred_fallthru
      _
    // Predicated region
    $region18: #{conv1d_padding_one.1} parent=1 // pred_check
      _
    $region19: #{conv1d_padding_one.1} parent=1 // pred_check_branch
      %247 = sbr.rel (0) target = $region21
    $region20: #{conv1d_padding_one.1} parent=1 // pred_region
      _
    $region21: #{conv1d_padding_one.1} parent=1 // pred_fallthru
      _
    %248 = vsyncpa [#allocation3], 1

</llo_original>
